<compile_context>
chip_gen: v7x
topology: tpu7x:2x2x1
jax: 0.10.0
libtpu: 0.0.40
codegen_flags: <defaults>
</compile_context>

<pallas_src>
import jax
import jax.numpy as jnp
from jax.experimental import pallas as pl
from jax.experimental.pallas import tpu as pltpu

_SUBLANE = 8


def _round_up(n, m):
    return ((n + m - 1) // m) * m


def fusion_kernel(x_ref, w1_ref, b1_ref, w2_ref, b2_ref, o_ref):
    # fc1 (+ bias) -> ReLU.  MXU matmul with f32 accumulation.
    h = jnp.dot(x_ref[...], w1_ref[...], preferred_element_type=jnp.float32)
    h = jnp.maximum(h + b1_ref[...], 0.0)
    # Dropout: inference-mode identity (nn.Dropout is a no-op in eval()).
    # TODO(synk): training-mode dropout would need pltpu.prng_seed +
    #             pltpu.prng_random_bits for an inverted-scale Bernoulli mask.
    # fc2 (+ bias).  Cast h to the weight dtype (identity in f32 mode).
    out = jnp.dot(h.astype(w2_ref.dtype), w2_ref[...],
                  preferred_element_type=jnp.float32)
    o_ref[...] = (out + b2_ref[...]).astype(o_ref.dtype)


def make_fusion_forward(w1, b1, w2, b2, *, batch_tile=2048, use_bf16=False):
    """Build a jitted forward(x) for FusionModel.

    w1: (D_in, H); b1: (H,) or (1, H); w2: (H, C); b2: (C,) or (1, C).
    Parameter dtype prep happens once here, not per call.
    """
    param_dtype = jnp.bfloat16 if use_bf16 else jnp.float32
    w1 = jnp.asarray(w1, param_dtype)
    w2 = jnp.asarray(w2, param_dtype)
    b1 = jnp.asarray(b1, jnp.float32).reshape(1, -1)
    b2 = jnp.asarray(b2, jnp.float32).reshape(1, -1)
    D_in, H = w1.shape
    C = w2.shape[1]

    @jax.jit
    def forward(x):
        B = x.shape[0]
        xin = x.astype(param_dtype)

        if B <= batch_tile:
            # Whole problem fits comfortably in VMEM: single invocation, no
            # grid, no pipelining, no double-buffered DMA pairs.
            Bp = _round_up(max(B, _SUBLANE), _SUBLANE)
            if Bp != B:
                xin = jnp.zeros((Bp, D_in), param_dtype).at[:B].set(xin)
            out = pl.pallas_call(
                fusion_kernel,
                out_shape=jax.ShapeDtypeStruct((Bp, C), jnp.float32),
                in_specs=[pl.BlockSpec(memory_space=pltpu.MemorySpace.VMEM)] * 5,
                out_specs=pl.BlockSpec(memory_space=pltpu.MemorySpace.VMEM),
            )(xin, w1, b1, w2, b2)
        else:
            # Large batch: tile only the batch dim.  Weights/biases stay
            # resident (constant block index), x/out are streamed and
            # double-buffered by the BlockSpec pipeline.
            Bp8 = _round_up(B, _SUBLANE)
            n_tiles = -(-Bp8 // batch_tile)            # ceil; always >= 2 here
            tb = _round_up(-(-Bp8 // n_tiles), _SUBLANE)
            Bp = tb * n_tiles                           # waste <= ~8 rows/tile
            if Bp != B:
                xin = jnp.zeros((Bp, D_in), param_dtype).at[:B].set(xin)
            out = pl.pallas_call(
                fusion_kernel,
                out_shape=jax.ShapeDtypeStruct((Bp, C), jnp.float32),
                grid_spec=pl.GridSpec(
                    grid=(n_tiles,),
                    in_specs=[
                        pl.BlockSpec((tb, D_in), lambda i: (i, 0)),
                        pl.BlockSpec((D_in, H), lambda i: (0, 0)),
                        pl.BlockSpec((1, H), lambda i: (0, 0)),
                        pl.BlockSpec((H, C), lambda i: (0, 0)),
                        pl.BlockSpec((1, C), lambda i: (0, 0)),
                    ],
                    out_specs=pl.BlockSpec((tb, C), lambda i: (i, 0)),
                ),
                compiler_params=pltpu.CompilerParams(
                    # Batch rows are independent -> v7x shards across its 2 TCs.
                    dimension_semantics=("parallel",),
                ),
            )(xin, w1, b1, w2, b2)

        # Padded rows (if any) carry garbage logits (ReLU(b1)@w2 + b2); the
        # slice below stays inside this jit so it fuses rather than re-reading
        # the output from HBM in a separate dispatch.
        return out[:B].astype(x.dtype)

    return forward


if __name__ == "__main__":
    # Module hyper-params (small, consistent with the forward pass).
    cnn_feature_dim = 24
    prosody_feature_dim = 8
    hidden_size = 32
    num_classes = 4
    batch = 8

    D_in = cnn_feature_dim + prosody_feature_dim

    key = jax.random.PRNGKey(0)
    k_x, k_w1, k_b1, k_w2, k_b2 = jax.random.split(key, 5)

    # Deterministic parameter init (uniform, PyTorch-Linear-style bounds).
    bound1 = 1.0 / (D_in ** 0.5)
    bound2 = 1.0 / (hidden_size ** 0.5)
    w1 = jax.random.uniform(k_w1, (D_in, hidden_size), jnp.float32, -bound1, bound1)
    b1 = jax.random.uniform(k_b1, (1, hidden_size), jnp.float32, -bound1, bound1)
    w2 = jax.random.uniform(k_w2, (hidden_size, num_classes), jnp.float32, -bound2, bound2)
    b2 = jax.random.uniform(k_b2, (1, num_classes), jnp.float32, -bound2, bound2)

    x = jax.random.normal(k_x, (batch, D_in), jnp.float32)

    # Build the model once (weight prep hoisted), then call it.
    fusion_forward = make_fusion_forward(w1, b1, w2, b2, batch_tile=2048)
    out = jax.block_until_ready(fusion_forward(x))

    # Reference check (pure JAX) to make sure the fused kernel is correct.
    ref = jnp.maximum(x @ w1 + b1, 0.0) @ w2 + b2
    assert out.shape == (batch, num_classes)
    assert jnp.allclose(out, ref, atol=1e-5, rtol=1e-5)

    print("KERNEL_OK")
</pallas_src>

<mosaic_0001>
module attributes {stable_mosaic.version = 11 : i64} {
  func.func @fusion_kernel(%arg0: memref<8x32xf32, #tpu.memory_space<vmem>>, %arg1: memref<32x32xf32, #tpu.memory_space<vmem>>, %arg2: memref<1x32xf32, #tpu.memory_space<vmem>>, %arg3: memref<32x4xf32, #tpu.memory_space<vmem>>, %arg4: memref<1x4xf32, #tpu.memory_space<vmem>>, %arg5: memref<8x4xf32, #tpu.memory_space<vmem>>) attributes {dimension_semantics = [], scalar_prefetch = 0 : i64, scratch_operands = 0 : i64, tpu.core_type = #tpu.core_type<tc>} {
    %c0 = arith.constant 0 : index
    %c0_0 = arith.constant 0 : index
    %0 = vector.load %arg0[%c0, %c0_0] : memref<8x32xf32, #tpu.memory_space<vmem>>, vector<8x32xf32>
    %c0_1 = arith.constant 0 : index
    %c0_2 = arith.constant 0 : index
    %1 = vector.load %arg1[%c0_1, %c0_2] : memref<32x32xf32, #tpu.memory_space<vmem>>, vector<32x32xf32>
    %cst = arith.constant dense<0.000000e+00> : vector<8x32xf32>
    %2 = tpu.matmul %0, %1, %cst {dimension_numbers = #tpu.dot_dimension_numbers<[1], [0], [0], [1], [0, 0, 1, 1], [], []>} : vector<8x32xf32>, vector<32x32xf32>, vector<8x32xf32> -> vector<8x32xf32>
    %c0_3 = arith.constant 0 : index
    %c0_4 = arith.constant 0 : index
    %3 = vector.load %arg2[%c0_3, %c0_4] : memref<1x32xf32, #tpu.memory_space<vmem>>, vector<1x32xf32>
    %4 = vector.broadcast %3 : vector<1x32xf32> to vector<8x32xf32>
    %5 = arith.addf %2, %4 : vector<8x32xf32>
    %cst_5 = arith.constant 0.000000e+00 : f32
    %6 = vector.broadcast %cst_5 : f32 to vector<8x32xf32>
    %7 = arith.maximumf %5, %6 : vector<8x32xf32>
    %c0_6 = arith.constant 0 : index
    %c0_7 = arith.constant 0 : index
    %8 = vector.load %arg3[%c0_6, %c0_7] : memref<32x4xf32, #tpu.memory_space<vmem>>, vector<32x4xf32>
    %cst_8 = arith.constant dense<0.000000e+00> : vector<8x4xf32>
    %9 = tpu.matmul %7, %8, %cst_8 {dimension_numbers = #tpu.dot_dimension_numbers<[1], [0], [0], [1], [0, 0, 1, 1], [], []>} : vector<8x32xf32>, vector<32x4xf32>, vector<8x4xf32> -> vector<8x4xf32>
    %c0_9 = arith.constant 0 : index
    %c0_10 = arith.constant 0 : index
    %10 = vector.load %arg4[%c0_9, %c0_10] : memref<1x4xf32, #tpu.memory_space<vmem>>, vector<1x4xf32>
    %11 = vector.broadcast %10 : vector<1x4xf32> to vector<8x4xf32>
    %12 = arith.addf %9, %11 : vector<8x4xf32>
    %c0_11 = arith.constant 0 : index
    %c0_12 = arith.constant 0 : index
    %13 = vector.load %arg5[%c0_11, %c0_12] : memref<8x4xf32, #tpu.memory_space<vmem>>, vector<8x4xf32>
    tpu.vector_store %arg5[%c0_11, %c0_12], %12 {strides = array<i32>} : memref<8x4xf32, #tpu.memory_space<vmem>>, vector<8x4xf32>,
    return
  }
}

</mosaic_0001>

<llo_original>
// kernel: forward.1
$region0: #{forward.1}
  #allocation0 [shape = 'u32[]', space=smem, size = 0x4, offset = 0x4, fixed_abs, tag = 'smem constant byte address 0x4 - core index']
  #allocation1 [shape = 'u32[144,128]{1,0:T(1,128)}', space=vmem, size = 0x12000, scoped, tag = 'internal scratch']
  %s0 = inlined_call_operand.hbm [shape: f32[8,32], index: 0, kind: input, shape index: {}]
  %s1 = inlined_call_operand.hbm [shape: f32[32,32], index: 1, kind: input, shape index: {}]
  %s2 = inlined_call_operand.vmem [shape: f32[1,32], index: 2, kind: input, shape index: {}]
  %s3 = inlined_call_operand.hbm [shape: f32[32,4], index: 3, kind: input, shape index: {}]
  %s4 = inlined_call_operand.vmem [shape: f32[1,4], index: 4, kind: input, shape index: {}]
  %s5 = inlined_call_operand.vmem [shape: f32[8,4], index: 5, kind: output, shape index: {}]
  %s6 = sld [smem:[#allocation0]]
  $region42: #{forward.1} parent=0
    _
  %s8 = ssub.s32 1, %s6
  %s9 = scalar_select 0, %s8, %s6
  $region1: #{forward.1} parent=0
    #allocation2 [shape = 'u8[4096]{0}', space=vmem, size = 0x1000, scoped, tag = 'input window, operand 0, single buffered']
    #allocation3 [shape = 's32[1]{0}', space=sflag, size = 0x4, scoped, tag = 'scoped memory for forward.1']
    #allocation4 [shape = 'u8[16384]{0}', space=vmem, size = 0x4000, scoped, tag = 'input window, operand 1, single buffered']
    #allocation5 [shape = 's32[1]{0}', space=sflag, size = 0x4, scoped, tag = 'scoped memory for forward.1']
    #allocation6 [shape = 'u8[16384]{0}', space=vmem, size = 0x4000, scoped, tag = 'input window, operand 3, single buffered']
    %10 = vsyncpa [#allocation3], 0
    %11 = vsyncpa [#allocation5], 0
    // Predicated region
    $region2: #{forward.1} parent=1 // pred_check
      _
    $region3: #{forward.1} parent=1 // pred_check_branch
      %13 = sbr.rel (0) target = $region5
    $region4: #{forward.1} parent=1 // pred_region
      %s15 = ssub.s32 128, 128
      %16 = vsyncadd [#allocation3], %s15
      %s18 = sshll.u32 [#allocation2], 4
      %s19 = int_to_ptr.vmem [resolvable:$true] %s18
      %21 = dma.hbm_to_vmem [thread:$0]  %s0, 128, %s19, [#allocation3]
    $region5: #{forward.1} parent=1 // pred_fallthru
      _
    // Predicated region
    $region6: #{forward.1} parent=1 // pred_check
      _
    $region7: #{forward.1} parent=1 // pred_check_branch
      %23 = sbr.rel (0) target = $region9
    $region8: #{forward.1} parent=1 // pred_region
      %s25 = ssub.s32 512, 512
      %26 = vsyncadd [#allocation5], %s25
      %s27 = sshll.u32 [#allocation4], 4
      %s28 = int_to_ptr.vmem [resolvable:$true] %s27
      %33 = dma.hbm_to_vmem [thread:$0]  %s1, 512, %s28, [#allocation5], 128, 128, 8
    $region9: #{forward.1} parent=1 // pred_fallthru
      _
    // Predicated region
    $region10: #{forward.1} parent=1 // pred_check
      _
    $region11: #{forward.1} parent=1 // pred_check_branch
      %35 = sbr.rel (0) target = $region13
    $region12: #{forward.1} parent=1 // pred_region
      _
    $region13: #{forward.1} parent=1 // pred_fallthru
      _
    // Predicated region
    $region14: #{forward.1} parent=1 // pred_check
      _
    $region15: #{forward.1} parent=1 // pred_check_branch
      %37 = sbr.rel (0) target = $region17
    $region16: #{forward.1} parent=1 // pred_region
      %s39 = ssub.s32 512, 512
      %40 = vsyncadd [#allocation5], %s39
      %s41 = sshll.u32 [#allocation6], 4
      %s42 = int_to_ptr.vmem [resolvable:$true] %s41
      %47 = dma.hbm_to_vmem [thread:$0]  %s3, 512, %s42, [#allocation5], 128, 128, 8
    $region17: #{forward.1} parent=1 // pred_fallthru
      _
    // Predicated region
    $region18: #{forward.1} parent=1 // pred_check
      _
    $region19: #{forward.1} parent=1 // pred_check_branch
      %49 = sbr.rel (0) target = $region21
    $region20: #{forward.1} parent=1 // pred_region
      _
    $region21: #{forward.1} parent=1 // pred_fallthru
      _
    // Predicated region
    $region22: #{forward.1} parent=1 // pred_check
      _
    $region23: #{forward.1} parent=1 // pred_check_branch
      %51 = sbr.rel (0) target = $region25
    $region24: #{forward.1} parent=1 // pred_region
      %52 = dma.done [#allocation3], 128
    $region25: #{forward.1} parent=1 // pred_fallthru
      _
    // Predicated region
    $region26: #{forward.1} parent=1 // pred_check
      _
    $region27: #{forward.1} parent=1 // pred_check_branch
      %54 = sbr.rel (0) target = $region29
    $region28: #{forward.1} parent=1 // pred_region
      %55 = dma.done [#allocation5], 512
    $region29: #{forward.1} parent=1 // pred_fallthru
      _
    // Predicated region
    $region30: #{forward.1} parent=1 // pred_check
      _
    $region31: #{forward.1} parent=1 // pred_check_branch
      %57 = sbr.rel (0) target = $region33
    $region32: #{forward.1} parent=1 // pred_region
      %58 = dma.done [#allocation5], 512
    $region33: #{forward.1} parent=1 // pred_fallthru
      _
    %v59 = vld [vmem:[#allocation2] sm:$0xff]
    %v60 = vld [vmem:[#allocation4] sm:$0xff]
    %v61 = vld [vmem:[#allocation4 + $0x8] sm:$0xff]
    %v62 = vld [vmem:[#allocation4 + $0x10] sm:$0xff]
    %v63 = vld [vmem:[#allocation4 + $0x18] sm:$0xff]
    %v64 = vld [vmem:[%s2] sm:$0x1]
    %v66 = vlaneseq
    %v67 = vshrl.u32 %v66, 7
    %v68 = vsub.s32 0, %v67
    %v69 = vrot.slane %v64, %v68
    %vm71 = vcmask 261120
    %v73 = vsel %vm71, %v59, 0
    %75 = vmatprep.subr.mxu0 0.0
    %76 = vmatpush1.msra.mxu0 %v60
    %77 = vmatprep.subr.mxu0 0.0
    %78 = vmatpush1.msra.mxu0 %v61
    %79 = vmatprep.subr.mxu0 0.0
    %80 = vmatpush1.msra.mxu0 %v62
    %81 = vmatprep.subr.mxu0 0.0
    %82 = vmatpush1.msra.mxu0 %v63
    %83 = vmatprep.subr.mxu0 0.0
    %84 = vmatpush1.msra.mxu0 0.0
    %85 = vmatprep.subr.mxu0 0.0
    %86 = vmatpush1.msra.mxu0 0.0
    %87 = vmatprep.subr.mxu0 0.0
    %88 = vmatpush1.msra.mxu0 0.0
    %89 = vmatprep.subr.mxu0 0.0
    %90 = vmatpush1.msra.mxu0 0.0
    %91 = vmatprep.subr.mxu0 0.0
    %92 = vmatpush1.msra.mxu0 0.0
    %93 = vmatprep.subr.mxu0 0.0
    %94 = vmatpush1.msra.mxu0 0.0
    %95 = vmatprep.subr.mxu0 0.0
    %96 = vmatpush1.msra.mxu0 0.0
    %97 = vmatprep.subr.mxu0 0.0
    %98 = vmatpush1.msra.mxu0 0.0
    %99 = vmatprep.subr.mxu0 0.0
    %100 = vmatpush1.msra.mxu0 0.0
    %101 = vmatprep.subr.mxu0 0.0
    %102 = vmatpush1.msra.mxu0 0.0
    %103 = vmatprep.subr.mxu0 0.0
    %104 = vmatpush1.msra.mxu0 0.0
    %105 = vmatprep.subr.mxu0 0.0
    %106 = vmatpush1.msra.mxu0 0.0
    %107 = vmatprep.subr.mxu0 0.0
    %108 = vmatpush1.msra.mxu0 0.0
    %109 = vmatprep.subr.mxu0 0.0
    %110 = vmatpush1.msra.mxu0 0.0
    %111 = vmatprep.subr.mxu0 0.0
    %112 = vmatpush1.msra.mxu0 0.0
    %113 = vmatprep.subr.mxu0 0.0
    %114 = vmatpush1.msra.mxu0 0.0
    %115 = vmatprep.subr.mxu0 0.0
    %116 = vmatpush1.msra.mxu0 0.0
    %117 = vmatprep.subr.mxu0 0.0
    %118 = vmatpush1.msra.mxu0 0.0
    %119 = vmatprep.subr.mxu0 0.0
    %120 = vmatpush1.msra.mxu0 0.0
    %121 = vmatprep.subr.mxu0 0.0
    %122 = vmatpush1.msra.mxu0 0.0
    %123 = vmatprep.subr.mxu0 0.0
    %124 = vmatpush1.msra.mxu0 0.0
    %125 = vmatprep.subr.mxu0 0.0
    %126 = vmatpush1.msra.mxu0 0.0
    %127 = vmatprep.subr.mxu0 0.0
    %128 = vmatpush1.msra.mxu0 0.0
    %129 = vmatprep.subr.mxu0 0.0
    %130 = vmatpush1.msra.mxu0 0.0
    %131 = vmatprep.subr.mxu0 0.0
    %132 = vmatpush1.msra.mxu0 0.0
    %133 = vmatprep.subr.mxu0 0.0
    %134 = vmatpush1.msra.mxu0 0.0
    %135 = vmatprep.subr.mxu0 0.0
    %136 = vmatpush1.msra.mxu0 0.0
    %137 = vmatprep.subr.mxu0 0.0
    %138 = vmatpush1.msra.mxu0 0.0
    %139 = vmatprep.mubr.f32.mxu0 0.0
    %140 = vmatmul.mubr.f32.gmra.mrb[0].mxu0 %v73
    %v141 = vpop.f32.mrb[0].mxu0
    %v142 = vadd.f32 %v69, %v141
    %v143 = vpop.f32.mrb[0].mxu0
    %144 = vdwg.mxu0
    %v145 = vmax.f32 %v142, 0.0
    %v146 = vld [vmem:[#allocation6] sm:$0xff]
    %v147 = vld [vmem:[#allocation6 + $0x8] sm:$0xff]
    %v148 = vld [vmem:[#allocation6 + $0x10] sm:$0xff]
    %v149 = vld [vmem:[#allocation6 + $0x18] sm:$0xff]
    %v150 = vld [vmem:[%s4] sm:$0x1]
    %v152 = vlaneseq
    %v153 = vshrl.u32 %v152, 7
    %v154 = vsub.s32 0, %v153
    %v155 = vrot.slane %v150, %v154
    %v158 = vsel %vm71, %v145, 0
    %160 = vmatprep.subr.mxu0 0.0
    %161 = vmatpush1.msra.mxu0 %v146
    %162 = vmatprep.subr.mxu0 0.0
    %163 = vmatpush1.msra.mxu0 %v147
    %164 = vmatprep.subr.mxu0 0.0
    %165 = vmatpush1.msra.mxu0 %v148
    %166 = vmatprep.subr.mxu0 0.0
    %167 = vmatpush1.msra.mxu0 %v149
    %168 = vmatprep.subr.mxu0 0.0
    %169 = vmatpush1.msra.mxu0 0.0
    %170 = vmatprep.subr.mxu0 0.0
    %171 = vmatpush1.msra.mxu0 0.0
    %172 = vmatprep.subr.mxu0 0.0
    %173 = vmatpush1.msra.mxu0 0.0
    %174 = vmatprep.subr.mxu0 0.0
    %175 = vmatpush1.msra.mxu0 0.0
    %176 = vmatprep.subr.mxu0 0.0
    %177 = vmatpush1.msra.mxu0 0.0
    %178 = vmatprep.subr.mxu0 0.0
    %179 = vmatpush1.msra.mxu0 0.0
    %180 = vmatprep.subr.mxu0 0.0
    %181 = vmatpush1.msra.mxu0 0.0
    %182 = vmatprep.subr.mxu0 0.0
    %183 = vmatpush1.msra.mxu0 0.0
    %184 = vmatprep.subr.mxu0 0.0
    %185 = vmatpush1.msra.mxu0 0.0
    %186 = vmatprep.subr.mxu0 0.0
    %187 = vmatpush1.msra.mxu0 0.0
    %188 = vmatprep.subr.mxu0 0.0
    %189 = vmatpush1.msra.mxu0 0.0
    %190 = vmatprep.subr.mxu0 0.0
    %191 = vmatpush1.msra.mxu0 0.0
    %192 = vmatprep.subr.mxu0 0.0
    %193 = vmatpush1.msra.mxu0 0.0
    %194 = vmatprep.subr.mxu0 0.0
    %195 = vmatpush1.msra.mxu0 0.0
    %196 = vmatprep.subr.mxu0 0.0
    %197 = vmatpush1.msra.mxu0 0.0
    %198 = vmatprep.subr.mxu0 0.0
    %199 = vmatpush1.msra.mxu0 0.0
    %200 = vmatprep.subr.mxu0 0.0
    %201 = vmatpush1.msra.mxu0 0.0
    %202 = vmatprep.subr.mxu0 0.0
    %203 = vmatpush1.msra.mxu0 0.0
    %204 = vmatprep.subr.mxu0 0.0
    %205 = vmatpush1.msra.mxu0 0.0
    %206 = vmatprep.subr.mxu0 0.0
    %207 = vmatpush1.msra.mxu0 0.0
    %208 = vmatprep.subr.mxu0 0.0
    %209 = vmatpush1.msra.mxu0 0.0
    %210 = vmatprep.subr.mxu0 0.0
    %211 = vmatpush1.msra.mxu0 0.0
    %212 = vmatprep.subr.mxu0 0.0
    %213 = vmatpush1.msra.mxu0 0.0
    %214 = vmatprep.subr.mxu0 0.0
    %215 = vmatpush1.msra.mxu0 0.0
    %216 = vmatprep.subr.mxu0 0.0
    %217 = vmatpush1.msra.mxu0 0.0
    %218 = vmatprep.subr.mxu0 0.0
    %219 = vmatpush1.msra.mxu0 0.0
    %220 = vmatprep.subr.mxu0 0.0
    %221 = vmatpush1.msra.mxu0 0.0
    %222 = vmatprep.subr.mxu0 0.0
    %223 = vmatpush1.msra.mxu0 0.0
    %224 = vmatprep.mubr.f32.mxu0 0.0
    %225 = vmatmul.mubr.f32.gmra.mrb[0].mxu0 %v158
    %v226 = vpop.f32.mrb[0].mxu0
    %v227 = vadd.f32 %v155, %v226
    %v228 = vpop.f32.mrb[0].mxu0
    %229 = vdwg.mxu0
    %vm230 = vcmask 31744
    %231 = vst.msk [vmem:[%s5] sm:$0xff] %vm230, %v227
    // Predicated region
    $region34: #{forward.1} parent=1 // pred_check
      _
    $region35: #{forward.1} parent=1 // pred_check_branch
      %233 = sbr.rel (0) target = $region37
    $region36: #{forward.1} parent=1 // pred_region
      _
    $region37: #{forward.1} parent=1 // pred_fallthru
      _
    // Predicated region
    $region38: #{forward.1} parent=1 // pred_check
      _
    $region39: #{forward.1} parent=1 // pred_check_branch
      %235 = sbr.rel (0) target = $region41
    $region40: #{forward.1} parent=1 // pred_region
      _
    $region41: #{forward.1} parent=1 // pred_fallthru
      _
    %236 = vsyncpa [#allocation3], 1
    %237 = vsyncpa [#allocation5], 1

</llo_original>
